<compile_context>
chip_gen: v5e
topology: v5e:2x2
jax: 0.10.0
libtpu: 0.0.40
codegen_flags: <defaults>
</compile_context>

<pallas_src>
import jax
import jax.numpy as jnp
from jax.experimental import pallas as pl
from jax.experimental.pallas import tpu as pltpu

BN_EPS = 1e-5


def res_mlp_kernel(x_ref, w1_ref, gamma_ref, beta_ref, w2_ref, b2_ref, o_ref, acc_ref):
    k = pl.program_id(0)

    @pl.when(k == 0)
    def _init():
        acc_ref[...] = jnp.zeros_like(acc_ref)

    # x is resident (constant index_map); narrow copy for the MXU only.
    x_mm = x_ref[...].astype(jnp.bfloat16)                       # [B, dim] bf16

    # --- Linear 1, hidden chunk (MXU, f32 accumulate). b1 omitted: cancelled by BN mean.
    h = jnp.dot(x_mm, w1_ref[...], preferred_element_type=jnp.float32)   # [B, tile_h] f32

    # --- BatchNorm1d (training-mode batch stats, biased var), folded to scale/shift.
    inv_b = 1.0 / h.shape[0]
    mean = jnp.sum(h, axis=0, keepdims=True) * inv_b
    msq = jnp.sum(h * h, axis=0, keepdims=True) * inv_b
    var = jnp.maximum(msq - mean * mean, 0.0)
    scale = gamma_ref[...] * jax.lax.rsqrt(var + BN_EPS)         # EUP rsqrt
    shift = beta_ref[...] - mean * scale

    # --- ReLU, then Linear 2 chunk accumulated into the f32 scratch.
    h_relu = jnp.maximum(h * scale + shift, 0.0)
    acc_ref[...] += jnp.dot(h_relu.astype(jnp.bfloat16), w2_ref[...],
                            preferred_element_type=jnp.float32)

    @pl.when(k == pl.num_programs(0) - 1)
    def _finalize():
        out = acc_ref[...] + b2_ref[...] + x_ref[...].astype(jnp.float32)
        o_ref[...] = out.astype(o_ref.dtype)


def _pick_tile_h(hidden):
    for t in (1024, 512, 256, 128):
        if hidden % t == 0:
            return t
    return hidden  # small / irregular hidden: single chunk


def res_mlp_forward(x, params, *, tile_h=None):
    """x: [B, dim]. params: dict with pre-transposed w1 [dim, hidden], w2 [hidden, dim]."""
    B, dim = x.shape
    hidden = params["w1"].shape[1]
    assert dim % 128 == 0, "pad the feature dim to a multiple of 128 (lane-dense stores)"
    if tile_h is None:
        tile_h = _pick_tile_h(hidden)
    assert hidden % tile_h == 0
    n_k = hidden // tile_h

    # bf16 weights from HBM (halves DMA traffic; MXU is bf16-native).
    w1 = params["w1"].astype(jnp.bfloat16)
    w2 = params["w2"].astype(jnp.bfloat16)
    gamma = params["gamma"].astype(jnp.float32)
    beta = params["beta"].astype(jnp.float32)
    b2 = params["b2"].astype(jnp.float32)

    # Per-step VMEM: resident x/out/b2 + one (dim,tile_h)+(tile_h,dim) bf16 weight slab
    # + gamma/beta chunks, all double-buffered, + f32 accumulator. Cap <= 48 MiB (v7x).
    blk_bytes = (B * dim * x.dtype.itemsize      # x (resident)
                 + dim * tile_h * 2              # w1 chunk (bf16)
                 + tile_h * dim * 2              # w2 chunk (bf16)
                 + 2 * tile_h * 4                # gamma, beta chunks
                 + dim * 4                       # b2
                 + B * dim * 4)                  # output block
    vmem_limit = int(min(max(2 * blk_bytes + B * dim * 4 + (4 << 20), 16 << 20), 48 << 20))

    grid_spec = pltpu.PrefetchScalarGridSpec(
        num_scalar_prefetch=0,
        grid=(n_k,),
        in_specs=[
            pl.BlockSpec((B, dim), lambda k: (0, 0)),        # x (resident across k)
            pl.BlockSpec((dim, tile_h), lambda k: (0, k)),   # w1 chunk
            pl.BlockSpec((1, tile_h), lambda k: (0, k)),     # gamma chunk
            pl.BlockSpec((1, tile_h), lambda k: (0, k)),     # beta chunk
            pl.BlockSpec((tile_h, dim), lambda k: (k, 0)),   # w2 chunk
            pl.BlockSpec((1, dim), lambda k: (0, 0)),        # b2 (resident)
        ],
        out_specs=pl.BlockSpec((B, dim), lambda k: (0, 0)),  # output (resident accumulator)
        scratch_shapes=[pltpu.VMEM((B, dim), jnp.float32)],  # f32 accumulator
    )

    return pl.pallas_call(
        res_mlp_kernel,
        out_shape=jax.ShapeDtypeStruct((B, dim), x.dtype),
        grid_spec=grid_spec,
        compiler_params=pltpu.CompilerParams(
            dimension_semantics=("arbitrary",),   # hidden-chunk axis is a reduction
            vmem_limit_bytes=vmem_limit,
        ),
    )(x, w1, gamma, beta, w2, b2)


def init_params(key, dim, hidden):
    """Deterministic synthetic parameters (shapes match MLP_sub(dim, dim, hidden, 2))."""
    k1, k2, k3, k4 = jax.random.split(key, 4)
    s1 = 1.0 / jnp.sqrt(dim)
    s2 = 1.0 / jnp.sqrt(hidden)
    return {
        # nn.Linear(dim, hidden): weight [hidden, dim] stored transposed -> [dim, hidden]
        "w1": jax.random.uniform(k1, (dim, hidden), jnp.float32, -s1, s1),
        "b1": jax.random.uniform(k2, (1, hidden), jnp.float32, -s1, s1),  # cancelled by BN
        # nn.BatchNorm1d(hidden): default init
        "gamma": jnp.ones((1, hidden), jnp.float32),
        "beta": jnp.zeros((1, hidden), jnp.float32),
        # nn.Linear(hidden, dim): weight [dim, hidden] stored transposed -> [hidden, dim]
        "w2": jax.random.uniform(k3, (hidden, dim), jnp.float32, -s2, s2),
        "b2": jax.random.uniform(k4, (1, dim), jnp.float32, -s2, s2),
    }


def res_mlp_reference_f32(x, params):
    """Pure-f32 reference matching the PyTorch module exactly (includes b1)."""
    h = x @ params["w1"] + params["b1"]
    mean = jnp.mean(h, axis=0, keepdims=True)
    var = jnp.mean((h - mean) ** 2, axis=0, keepdims=True)
    h = (h - mean) / jnp.sqrt(var + BN_EPS) * params["gamma"] + params["beta"]
    h = jnp.maximum(h, 0.0)
    return h @ params["w2"] + params["b2"] + x


def res_mlp_reference_mixed(x, params):
    """Reference mirroring the kernel's bf16 matmul inputs / f32 math (plumbing check)."""
    h = jnp.dot(x.astype(jnp.bfloat16), params["w1"].astype(jnp.bfloat16),
                preferred_element_type=jnp.float32)
    mean = jnp.mean(h, axis=0, keepdims=True)
    msq = jnp.mean(h * h, axis=0, keepdims=True)
    var = jnp.maximum(msq - mean * mean, 0.0)
    scale = params["gamma"] * jax.lax.rsqrt(var + BN_EPS)
    shift = params["beta"] - mean * scale
    hr = jnp.maximum(h * scale + shift, 0.0)
    out = jnp.dot(hr.astype(jnp.bfloat16), params["w2"].astype(jnp.bfloat16),
                  preferred_element_type=jnp.float32)
    return out + params["b2"] + x


if __name__ == "__main__":
    # Small shapes: projection_size == dim (residual requirement), dim multiple of 128,
    # batch >= 16 (bf16 sublane packing), hidden split into 2 chunks to exercise the grid.
    B, dim, hidden = 16, 128, 512
    key = jax.random.PRNGKey(0)
    kx, kp = jax.random.split(key)

    x = jax.random.normal(kx, (B, dim), jnp.float32)
    params = init_params(kp, dim, hidden)

    out = res_mlp_forward(x, params, tile_h=256)
    jax.block_until_ready(out)

    assert out.shape == (B, dim)
    ref_mixed = res_mlp_reference_mixed(x, params)
    ref_f32 = res_mlp_reference_f32(x, params)
    assert jnp.allclose(out, ref_mixed, atol=2e-3, rtol=2e-3), "mismatch vs mixed-precision reference"
    assert jnp.allclose(out, ref_f32, atol=5e-2, rtol=5e-2), "mismatch vs f32 module reference"

    print("KERNEL_OK")
</pallas_src>

<mosaic_0001>
module attributes {stable_mosaic.version = 11 : i64} {
  func.func @res_mlp_kernel(%arg0: i32, %arg1: memref<16x128xf32, #tpu.memory_space<vmem>>, %arg2: memref<128x256xbf16, #tpu.memory_space<vmem>>, %arg3: memref<1x256xf32, #tpu.memory_space<vmem>>, %arg4: memref<1x256xf32, #tpu.memory_space<vmem>>, %arg5: memref<256x128xbf16, #tpu.memory_space<vmem>>, %arg6: memref<1x128xf32, #tpu.memory_space<vmem>>, %arg7: memref<16x128xf32, #tpu.memory_space<vmem>>, %arg8: memref<16x128xf32, #tpu.memory_space<vmem>>) attributes {dimension_semantics = [#tpu.dimension_semantics<arbitrary>], iteration_bounds = array<i64: 2>, scalar_prefetch = 0 : i64, scratch_operands = 1 : i64, tpu.core_type = #tpu.core_type<tc>, window_params = [{pipeline_mode = #tpu.pipeline_mode<synchronous>, transform_indices = @transform_0, window_bounds = array<i64: 16, 128>}, {transform_indices = @transform_1, window_bounds = array<i64: 128, 256>}, {transform_indices = @transform_2, window_bounds = array<i64: 1, 256>}, {transform_indices = @transform_3, window_bounds = array<i64: 1, 256>}, {transform_indices = @transform_4, window_bounds = array<i64: 256, 128>}, {pipeline_mode = #tpu.pipeline_mode<synchronous>, transform_indices = @transform_5, window_bounds = array<i64: 1, 128>}, {pipeline_mode = #tpu.pipeline_mode<synchronous>, transform_indices = @transform_6, window_bounds = array<i64: 16, 128>}]} {
    %c0_i32 = arith.constant 0 : i32
    %0 = arith.cmpi eq, %arg0, %c0_i32 : i32
    %1 = arith.extui %0 : i1 to i32
    %c0_i32_0 = arith.constant 0 : i32
    %2 = arith.cmpi ne, %1, %c0_i32_0 : i32
    scf.if %2 {
      %cst_23 = arith.constant 0.000000e+00 : f32
      %43 = vector.broadcast %cst_23 : f32 to vector<16x128xf32>
      %c0_24 = arith.constant 0 : index
      %c0_25 = arith.constant 0 : index
      %44 = vector.load %arg8[%c0_24, %c0_25] : memref<16x128xf32, #tpu.memory_space<vmem>>, vector<16x128xf32>
      tpu.vector_store %arg8[%c0_24, %c0_25], %43 {strides = array<i32>} : memref<16x128xf32, #tpu.memory_space<vmem>>, vector<16x128xf32>,
    } else {
    }
    %c0 = arith.constant 0 : index
    %c0_1 = arith.constant 0 : index
    %3 = vector.load %arg1[%c0, %c0_1] : memref<16x128xf32, #tpu.memory_space<vmem>>, vector<16x128xf32>
    %4 = arith.truncf %3 : vector<16x128xf32> to vector<16x128xbf16>
    %c0_2 = arith.constant 0 : index
    %c0_3 = arith.constant 0 : index
    %5 = vector.load %arg2[%c0_2, %c0_3] : memref<128x256xbf16, #tpu.memory_space<vmem>>, vector<128x256xbf16>
    %cst = arith.constant dense<0.000000e+00> : vector<16x256xf32>
    %6 = tpu.matmul %4, %5, %cst {dimension_numbers = #tpu.dot_dimension_numbers<[1], [0], [0], [1], [0, 0, 1, 1], [], []>} : vector<16x128xbf16>, vector<128x256xbf16>, vector<16x256xf32> -> vector<16x256xf32>
    %cst_4 = arith.constant dense<0.000000e+00> : vector<256xf32>
    %7 = vector.multi_reduction <add>, %6, %cst_4 [0] : vector<16x256xf32> to vector<256xf32>
    %8 = vector.shape_cast %7 : vector<256xf32> to vector<1x256xf32>
    %cst_5 = arith.constant 6.250000e-02 : f32
    %9 = vector.broadcast %cst_5 : f32 to vector<1x256xf32>
    %10 = arith.mulf %8, %9 : vector<1x256xf32>
    %11 = arith.mulf %6, %6 : vector<16x256xf32>
    %cst_6 = arith.constant dense<0.000000e+00> : vector<256xf32>
    %12 = vector.multi_reduction <add>, %11, %cst_6 [0] : vector<16x256xf32> to vector<256xf32>
    %13 = vector.shape_cast %12 : vector<256xf32> to vector<1x256xf32>
    %cst_7 = arith.constant 6.250000e-02 : f32
    %14 = vector.broadcast %cst_7 : f32 to vector<1x256xf32>
    %15 = arith.mulf %13, %14 : vector<1x256xf32>
    %16 = arith.mulf %10, %10 : vector<1x256xf32>
    %17 = arith.subf %15, %16 : vector<1x256xf32>
    %cst_8 = arith.constant 0.000000e+00 : f32
    %18 = vector.broadcast %cst_8 : f32 to vector<1x256xf32>
    %19 = arith.maximumf %17, %18 : vector<1x256xf32>
    %c0_9 = arith.constant 0 : index
    %c0_10 = arith.constant 0 : index
    %20 = vector.load %arg3[%c0_9, %c0_10] : memref<1x256xf32, #tpu.memory_space<vmem>>, vector<1x256xf32>
    %cst_11 = arith.constant 9.99999974E-6 : f32
    %21 = vector.broadcast %cst_11 : f32 to vector<1x256xf32>
    %22 = arith.addf %19, %21 : vector<1x256xf32>
    %23 = math.rsqrt %22 : vector<1x256xf32>
    %24 = arith.mulf %20, %23 : vector<1x256xf32>
    %c0_12 = arith.constant 0 : index
    %c0_13 = arith.constant 0 : index
    %25 = vector.load %arg4[%c0_12, %c0_13] : memref<1x256xf32, #tpu.memory_space<vmem>>, vector<1x256xf32>
    %26 = arith.mulf %10, %24 : vector<1x256xf32>
    %27 = arith.subf %25, %26 : vector<1x256xf32>
    %28 = vector.broadcast %24 : vector<1x256xf32> to vector<16x256xf32>
    %29 = arith.mulf %6, %28 : vector<16x256xf32>
    %30 = vector.broadcast %27 : vector<1x256xf32> to vector<16x256xf32>
    %31 = arith.addf %29, %30 : vector<16x256xf32>
    %cst_14 = arith.constant 0.000000e+00 : f32
    %32 = vector.broadcast %cst_14 : f32 to vector<16x256xf32>
    %33 = arith.maximumf %31, %32 : vector<16x256xf32>
    %c0_15 = arith.constant 0 : index
    %c0_16 = arith.constant 0 : index
    %34 = vector.load %arg8[%c0_15, %c0_16] : memref<16x128xf32, #tpu.memory_space<vmem>>, vector<16x128xf32>
    %35 = arith.truncf %33 : vector<16x256xf32> to vector<16x256xbf16>
    %c0_17 = arith.constant 0 : index
    %c0_18 = arith.constant 0 : index
    %36 = vector.load %arg5[%c0_17, %c0_18] : memref<256x128xbf16, #tpu.memory_space<vmem>>, vector<256x128xbf16>
    %cst_19 = arith.constant dense<0.000000e+00> : vector<16x128xf32>
    %37 = tpu.matmul %35, %36, %cst_19 {dimension_numbers = #tpu.dot_dimension_numbers<[1], [0], [0], [1], [0, 0, 1, 1], [], []>} : vector<16x256xbf16>, vector<256x128xbf16>, vector<16x128xf32> -> vector<16x128xf32>
    %38 = arith.addf %34, %37 : vector<16x128xf32>
    %c0_20 = arith.constant 0 : index
    %c0_21 = arith.constant 0 : index
    %39 = vector.load %arg8[%c0_20, %c0_21] : memref<16x128xf32, #tpu.memory_space<vmem>>, vector<16x128xf32>
    tpu.vector_store %arg8[%c0_20, %c0_21], %38 {strides = array<i32>} : memref<16x128xf32, #tpu.memory_space<vmem>>, vector<16x128xf32>,
    %c1_i32 = arith.constant 1 : i32
    %40 = arith.cmpi eq, %arg0, %c1_i32 : i32
    %41 = arith.extui %40 : i1 to i32
    %c0_i32_22 = arith.constant 0 : i32
    %42 = arith.cmpi ne, %41, %c0_i32_22 : i32
    scf.if %42 {
      %c0_23 = arith.constant 0 : index
      %c0_24 = arith.constant 0 : index
      %43 = vector.load %arg8[%c0_23, %c0_24] : memref<16x128xf32, #tpu.memory_space<vmem>>, vector<16x128xf32>
      %c0_25 = arith.constant 0 : index
      %c0_26 = arith.constant 0 : index
      %44 = vector.load %arg6[%c0_25, %c0_26] : memref<1x128xf32, #tpu.memory_space<vmem>>, vector<1x128xf32>
      %45 = vector.broadcast %44 : vector<1x128xf32> to vector<16x128xf32>
      %46 = arith.addf %43, %45 : vector<16x128xf32>
      %c0_27 = arith.constant 0 : index
      %c0_28 = arith.constant 0 : index
      %47 = vector.load %arg1[%c0_27, %c0_28] : memref<16x128xf32, #tpu.memory_space<vmem>>, vector<16x128xf32>
      %48 = arith.addf %46, %47 : vector<16x128xf32>
      %c0_29 = arith.constant 0 : index
      %c0_30 = arith.constant 0 : index
      %49 = vector.load %arg7[%c0_29, %c0_30] : memref<16x128xf32, #tpu.memory_space<vmem>>, vector<16x128xf32>
      tpu.vector_store %arg7[%c0_29, %c0_30], %48 {strides = array<i32>} : memref<16x128xf32, #tpu.memory_space<vmem>>, vector<16x128xf32>,
    } else {
    }
    return
  }
  func.func @transform_0(%arg0: i32) -> (i32, i32) {
    %c0_i32 = arith.constant 0 : i32
    %c0_i32_0 = arith.constant 0 : i32
    %c0_i32_1 = arith.constant 0 : i32
    return %c0_i32, %c0_i32_0 : i32, i32
  }
  func.func @transform_1(%arg0: i32) -> (i32, i32) {
    %c0_i32 = arith.constant 0 : i32
    %c0_i32_0 = arith.constant 0 : i32
    return %c0_i32, %arg0 : i32, i32
  }
  func.func @transform_2(%arg0: i32) -> (i32, i32) {
    %c0_i32 = arith.constant 0 : i32
    %c0_i32_0 = arith.constant 0 : i32
    return %c0_i32, %arg0 : i32, i32
  }
  func.func @transform_3(%arg0: i32) -> (i32, i32) {
    %c0_i32 = arith.constant 0 : i32
    %c0_i32_0 = arith.constant 0 : i32
    return %c0_i32, %arg0 : i32, i32
  }
  func.func @transform_4(%arg0: i32) -> (i32, i32) {
    %c0_i32 = arith.constant 0 : i32
    %c0_i32_0 = arith.constant 0 : i32
    return %arg0, %c0_i32 : i32, i32
  }
  func.func @transform_5(%arg0: i32) -> (i32, i32) {
    %c0_i32 = arith.constant 0 : i32
    %c0_i32_0 = arith.constant 0 : i32
    %c0_i32_1 = arith.constant 0 : i32
    return %c0_i32, %c0_i32_0 : i32, i32
  }
  func.func @transform_6(%arg0: i32) -> (i32, i32) {
    %c0_i32 = arith.constant 0 : i32
    %c0_i32_0 = arith.constant 0 : i32
    %c0_i32_1 = arith.constant 0 : i32
    return %c0_i32, %c0_i32_0 : i32, i32
  }
}

</mosaic_0001>

<llo_original>
// kernel: tpu_custom_call.1
$region0: #{tpu_custom_call.1}
  #allocation0 [shape = 'u32[]', space=smem, size = 0x4, offset = 0x4, fixed_abs, tag = 'smem constant byte address 0x4 - core index']
  #allocation1 [shape = 'u32[72,128]{1,0:T(1,128)}', space=vmem, size = 0x9000, scoped, tag = 'internal scratch']
  #allocation2 [shape = 'f32[16,128]{1,0:T(8,128)}', space=vmem, size = 0x2000, scoped, tag = 'scratch operand']
  %s0 = inlined_call_operand.hbm [shape: f32[16,128], index: 0, kind: input, shape index: {}]
  %s1 = inlined_call_operand.hbm [shape: bf16[128,512], index: 1, kind: input, shape index: {}]
  %s2 = inlined_call_operand.hbm [shape: f32[1,512], index: 2, kind: input, shape index: {}]
  %s3 = inlined_call_operand.hbm [shape: f32[1,512], index: 3, kind: input, shape index: {}]
  %s4 = inlined_call_operand.hbm [shape: bf16[512,128], index: 4, kind: input, shape index: {}]
  %s5 = inlined_call_operand.vmem [shape: f32[1,128], index: 5, kind: input, shape index: {}]
  %s6 = inlined_call_operand.hbm [shape: f32[16,128], index: 6, kind: output, shape index: {}]
  %s7 = sld [smem:[#allocation0]]
  $region85: #{tpu_custom_call.1} parent=0
    _
  %s9 = ssub.s32 1, %s7
  %s10 = scalar_select 0, %s9, %s7
  $region1: #{tpu_custom_call.1} parent=0
    #allocation3 [shape = 'u8[8192]{0}', space=vmem, size = 0x2000, scoped, tag = 'input window, operand 0, single buffered']
    #allocation4 [shape = 's32[2]{0}', space=sflag, size = 0x8, scoped, tag = 'scoped memory for tpu_custom_call.1']
    #allocation5 [shape = 's32[2]{0}', space=sflag, size = 0x8, scoped, tag = 'scoped memory for tpu_custom_call.1']
    #allocation6 [shape = 'u8[131072]{0}', space=vmem, size = 0x20000, scoped, tag = 'input window, operand 1']
    #allocation7 [shape = 's32[2]{0}', space=sflag, size = 0x8, scoped, tag = 'scoped memory for tpu_custom_call.1']
    #allocation8 [shape = 'u8[2048]{0}', space=vmem, size = 0x800, scoped, tag = 'input window, operand 2']
    #allocation9 [shape = 'u8[2048]{0}', space=vmem, size = 0x800, scoped, tag = 'input window, operand 3']
    #allocation10 [shape = 's32[2]{0}', space=sflag, size = 0x8, scoped, tag = 'scoped memory for tpu_custom_call.1']
    #allocation11 [shape = 'u8[131072]{0}', space=vmem, size = 0x20000, scoped, tag = 'input window, operand 4']
    #allocation12 [shape = 'u8[8192]{0}', space=vmem, size = 0x2000, scoped, tag = 'output window, operand 0, single buffered']
    %11 = vsyncpa [#allocation4], 0
    %12 = vsyncpa [#allocation7], 0
    %s13 = scalar_lea.sflag [#allocation7], 1
    %14 = vsyncpa %s13, 0
    %15 = vsyncpa [#allocation10], 0
    %s16 = scalar_lea.sflag [#allocation10], 1
    %17 = vsyncpa %s16, 0
    %18 = vsyncpa [#allocation5], 0
    loop: start=0, step=1, limit=4
    $region2: #{tpu_custom_call.1} parent=1 // loop_pre_header
      _
    $region3: #{tpu_custom_call.1} parent=1 // loop_header
      %s20 = sphi 0, %s24
      %p21 = scmp.ge.s32.totalorder %s20, 4
      %s28 = sphi 0, %s28
      %s30 = sphi 0, %s28
      %s31 = sphi 0, %s30
      %s45 = sphi 0, %s31
      %s51 = sphi 0, %s53
      %s54 = sphi 0, %s51
      %s55 = sphi 0, %s54
      %s71 = sphi 0, %s55
      %s77 = sphi 0, %s79
      %s80 = sphi 0, %s77
      %s81 = sphi 0, %s80
      %s97 = sphi 0, %s81
      %s103 = sphi 0, %s105
      %s106 = sphi 0, %s103
      %s107 = sphi 0, %s106
      %s123 = sphi 0, %s107
      %s129 = sphi 0, %s131
      %s132 = sphi 0, %s129
      %s133 = sphi 0, %s132
      %s149 = sphi 0, %s133
      %s153 = sphi 0, %s153
      %s155 = sphi 0, %s153
      %s156 = sphi 0, %s155
      %s170 = sphi 0, %s156
      %s174 = sphi 0, %s174
      %s176 = sphi 0, %s174
      %s177 = sphi 0, %s176
      %s191 = sphi 0, %s177
    $region4: #{tpu_custom_call.1} parent=1 // loop_header_branch
      %23 = sbr.rel (%p21) target = $region8
    $region5: #{tpu_custom_call.1} parent=1 // loop_body
      %s25 = ssub.s32 %s20, 1
      %s26 = ssub.s32 %s20, 2
      %s27 = sadd.s32 %s20, 1
      %s29 = sadd.s32 %s28, 1
      %p32 = scmp.eq.s32.totalorder %s20, 1
      %p33 = scmp.ne.s32.totalorder %s28, %s30
      %p34 = scmp.eq.s32.totalorder %s20, 0
      %p35 = por %p33, %p34
      %p36 = scmp.ne.s32.totalorder %s28, %s30
      %p37 = scmp.eq.s32.totalorder %s25, 1
      %p38 = por %p36, %p37
      %p39 = scmp.ne.s32.totalorder %s30, %s31
      %p40 = scmp.eq.s32.totalorder %s25, 0
      %p41 = por %p39, %p40
      %p42 = scmp.ne.s32.totalorder %s30, %s31
      %p43 = scmp.eq.s32.totalorder %s26, 1
      %p44 = por %p42, %p43
      %p46 = scmp.ne.s32.totalorder %s31, %s45
      %p47 = scmp.eq.s32.totalorder %s26, 0
      %p48 = por %p46, %p47
      %s49 = ssub.s32 %s20, %s27
      %p50 = scmp.eq.s32.totalorder %s49, 0
      %s52 = sadd.s32 %s51, 1
      %s53 = scalar_select %p50, %s51, %s52
      %p56 = pneg %p50
      %p57 = scmp.eq.s32.totalorder %s20, 1
      %p58 = por %p56, %p57
      %p59 = scmp.ne.s32.totalorder %s51, %s54
      %p60 = scmp.eq.s32.totalorder %s20, 0
      %p61 = por %p59, %p60
      %p62 = scmp.ne.s32.totalorder %s51, %s54
      %p63 = scmp.eq.s32.totalorder %s25, 1
      %p64 = por %p62, %p63
      %p65 = scmp.ne.s32.totalorder %s54, %s55
      %p66 = scmp.eq.s32.totalorder %s25, 0
      %p67 = por %p65, %p66
      %p68 = scmp.ne.s32.totalorder %s54, %s55
      %p69 = scmp.eq.s32.totalorder %s26, 1
      %p70 = por %p68, %p69
      %p72 = scmp.ne.s32.totalorder %s55, %s71
      %p73 = scmp.eq.s32.totalorder %s26, 0
      %p74 = por %p72, %p73
      %s75 = ssub.s32 %s20, %s27
      %p76 = scmp.eq.s32.totalorder %s75, 0
      %s78 = sadd.s32 %s77, 1
      %s79 = scalar_select %p76, %s77, %s78
      %p82 = pneg %p76
      %p83 = scmp.eq.s32.totalorder %s20, 1
      %p84 = por %p82, %p83
      %p85 = scmp.ne.s32.totalorder %s77, %s80
      %p86 = scmp.eq.s32.totalorder %s20, 0
      %p87 = por %p85, %p86
      %p88 = scmp.ne.s32.totalorder %s77, %s80
      %p89 = scmp.eq.s32.totalorder %s25, 1
      %p90 = por %p88, %p89
      %p91 = scmp.ne.s32.totalorder %s80, %s81
      %p92 = scmp.eq.s32.totalorder %s25, 0
      %p93 = por %p91, %p92
      %p94 = scmp.ne.s32.totalorder %s80, %s81
      %p95 = scmp.eq.s32.totalorder %s26, 1
      %p96 = por %p94, %p95
      %p98 = scmp.ne.s32.totalorder %s81, %s97
      %p99 = scmp.eq.s32.totalorder %s26, 0
      %p100 = por %p98, %p99
      %s101 = ssub.s32 %s20, %s27
      %p102 = scmp.eq.s32.totalorder %s101, 0
      %s104 = sadd.s32 %s103, 1
      %s105 = scalar_select %p102, %s103, %s104
      %p108 = pneg %p102
      %p109 = scmp.eq.s32.totalorder %s20, 1
      %p110 = por %p108, %p109
      %p111 = scmp.ne.s32.totalorder %s103, %s106
      %p112 = scmp.eq.s32.totalorder %s20, 0
      %p113 = por %p111, %p112
      %p114 = scmp.ne.s32.totalorder %s103, %s106
      %p115 = scmp.eq.s32.totalorder %s25, 1
      %p116 = por %p114, %p115
      %p117 = scmp.ne.s32.totalorder %s106, %s107
      %p118 = scmp.eq.s32.totalorder %s25, 0
      %p119 = por %p117, %p118
      %p120 = scmp.ne.s32.totalorder %s106, %s107
      %p121 = scmp.eq.s32.totalorder %s26, 1
      %p122 = por %p120, %p121
      %p124 = scmp.ne.s32.totalorder %s107, %s123
      %p125 = scmp.eq.s32.totalorder %s26, 0
      %p126 = por %p124, %p125
      %s127 = ssub.s32 %s20, %s27
      %p128 = scmp.eq.s32.totalorder %s127, 0
      %s130 = sadd.s32 %s129, 1
      %s131 = scalar_select %p128, %s129, %s130
      %p134 = pneg %p128
      %p135 = scmp.eq.s32.totalorder %s20, 1
      %p136 = por %p134, %p135
      %p137 = scmp.ne.s32.totalorder %s129, %s132
      %p138 = scmp.eq.s32.totalorder %s20, 0
      %p139 = por %p137, %p138
      %p140 = scmp.ne.s32.totalorder %s129, %s132
      %p141 = scmp.eq.s32.totalorder %s25, 1
      %p142 = por %p140, %p141
      %p143 = scmp.ne.s32.totalorder %s132, %s133
      %p144 = scmp.eq.s32.totalorder %s25, 0
      %p145 = por %p143, %p144
      %p146 = scmp.ne.s32.totalorder %s132, %s133
      %p147 = scmp.eq.s32.totalorder %s26, 1
      %p148 = por %p146, %p147
      %p150 = scmp.ne.s32.totalorder %s133, %s149
      %p151 = scmp.eq.s32.totalorder %s26, 0
      %p152 = por %p150, %p151
      %s154 = sadd.s32 %s153, 1
      %p157 = scmp.eq.s32.totalorder %s20, 1
      %p158 = scmp.ne.s32.totalorder %s153, %s155
      %p159 = scmp.eq.s32.totalorder %s20, 0
      %p160 = por %p158, %p159
      %p161 = scmp.ne.s32.totalorder %s153, %s155
      %p162 = scmp.eq.s32.totalorder %s25, 1
      %p163 = por %p161, %p162
      %p164 = scmp.ne.s32.totalorder %s155, %s156
      %p165 = scmp.eq.s32.totalorder %s25, 0
      %p166 = por %p164, %p165
      %p167 = scmp.ne.s32.totalorder %s155, %s156
      %p168 = scmp.eq.s32.totalorder %s26, 1
      %p169 = por %p167, %p168
      %p171 = scmp.ne.s32.totalorder %s156, %s170
      %p172 = scmp.eq.s32.totalorder %s26, 0
      %p173 = por %p171, %p172
      %s175 = sadd.s32 %s174, 1
      %p178 = scmp.eq.s32.totalorder %s20, 1
      %p179 = scmp.ne.s32.totalorder %s174, %s176
      %p180 = scmp.eq.s32.totalorder %s20, 0
      %p181 = por %p179, %p180
      %p182 = scmp.ne.s32.totalorder %s174, %s176
      %p183 = scmp.eq.s32.totalorder %s25, 1
      %p184 = por %p182, %p183
      %p185 = scmp.ne.s32.totalorder %s176, %s177
      %p186 = scmp.eq.s32.totalorder %s25, 0
      %p187 = por %p185, %p186
      %p188 = scmp.ne.s32.totalorder %s176, %s177
      %p189 = scmp.eq.s32.totalorder %s26, 1
      %p190 = por %p188, %p189
      %p192 = scmp.ne.s32.totalorder %s177, %s191
      %p193 = scmp.eq.s32.totalorder %s26, 0
      %p194 = por %p192, %p193
      %p195 = scmp.le.s32.totalorder 1, %s20
      %p196 = scmp.lt.s32.totalorder %s20, 3
      %p197 = pnand %p195, %p196
      %p198 = pneg %p197
      // Predicated region
      $region9: #{tpu_custom_call.1} parent=5 // pred_check
        _
      $region10: #{tpu_custom_call.1} parent=5 // pred_check_branch
        %200 = sbr.rel (%p197) target = $region12
      $region11: #{tpu_custom_call.1} parent=5 // pred_region
        %s201 = ssub.s32 %s20, 1
        // Predicated region
        $region13: #{tpu_custom_call.1} parent=11 // pred_check
          %p202 = pneg %p41
        $region14: #{tpu_custom_call.1} parent=11 // pred_check_branch
          %204 = sbr.rel (%p202) target = $region16
        $region15: #{tpu_custom_call.1} parent=11 // pred_region
          %206 = vsyncadd [#allocation4], 0
          %s207 = sshll.u32 %s0, 4
          %s208 = int_to_ptr.hbm [resolvable:$true] %s207
          %s209 = sshll.u32 [#allocation3], 4
          %s210 = int_to_ptr.vmem [resolvable:$true] %s209
          %215 = dma.hbm_to_vmem [thread:$0]  %s208, 256, %s210, [#allocation4], 128, 128, 8
        $region16: #{tpu_custom_call.1} parent=11 // pred_fallthru
          _
        // Predicated region
        $region17: #{tpu_custom_call.1} parent=11 // pred_check
          %p216 = pneg %p166
        $region18: #{tpu_custom_call.1} parent=11 // pred_check_branch
          %218 = sbr.rel (%p216) target = $region20
        $region19: #{tpu_custom_call.1} parent=11 // pred_region
          _
        $region20: #{tpu_custom_call.1} parent=11 // pred_fallthru
          _
      $region12: #{tpu_custom_call.1} parent=5 // pred_fallthru
        _
      %p219 = scmp.lt.s32.totalorder %s20, 2
      // Predicated region
      $region21: #{tpu_custom_call.1} parent=5 // pred_check
        %p220 = pneg %p219
      $region22: #{tpu_custom_call.1} parent=5 // pred_check_branch
        %222 = sbr.rel (%p220) target = $region24
      $region23: #{tpu_custom_call.1} parent=5 // pred_region
        // Predicated region
        $region25: #{tpu_custom_call.1} parent=23 // pred_check
          %p223 = pneg %p61
        $region26: #{tpu_custom_call.1} parent=23 // pred_check_branch
          %225 = sbr.rel (%p223) target = $region28
        $region27: #{tpu_custom_call.1} parent=23 // pred_region
          %s226 = sand.u32 %s20, 1
          %s227 = scalar_lea.sflag [#allocation7], %s226
          %s228 = sand.u32 %s51, 1
          %s229 = smul.addr %s228, 128
          %s230 = scalar_lea.vmem [#allocation6], %s229
          %s231 = smul.u32 2, %s20
          %233 = vsyncadd %s227, 0
          %s234 = smul.addr %s231, 4
          %s235 = scalar_lea.hbm %s1, %s234
          %s236 = sshll.u32 %s235, 4
          %s237 = int_to_ptr.hbm [resolvable:$true] %s236
          %s238 = sshll.u32 %s230, 4
          %s239 = int_to_ptr.vmem [resolvable:$true] %s238
          %244 = dma.hbm_to_vmem [thread:$0]  %s237, 2048, %s239, %s227, 256, 128, 8
        $region28: #{tpu_custom_call.1} parent=23 // pred_fallthru
          _
        // Predicated region
        $region29: #{tpu_custom_call.1} parent=23 // pred_check
          %p245 = pneg %p87
        $region30: #{tpu_custom_call.1} parent=23 // pred_check_branch
          %247 = sbr.rel (%p245) target = $region32
        $region31: #{tpu_custom_call.1} parent=23 // pred_region
          %s248 = sand.u32 %s20, 1
          %s249 = scalar_lea.sflag [#allocation7], %s248
          %s250 = sand.u32 %s77, 1
          %s251 = smul.addr %s250, 2
          %s252 = scalar_lea.vmem [#allocation8], %s251
          %s253 = smul.u32 2, %s20
          %255 = vsyncadd %s249, 0
          %s256 = scalar_lea.hbm %s2, %s253
          %s258 = sshll.u32 %s256, 4
          %s259 = int_to_ptr.hbm [resolvable:$true] %s258
          %s260 = sshll.u32 %s252, 4
          %s261 = int_to_ptr.vmem [resolvable:$true] %s260
          %263 = dma.hbm_to_vmem [thread:$0]  %s259, 32, %s261, %s249
        $region32: #{tpu_custom_call.1} parent=23 // pred_fallthru
          _
        // Predicated region
        $region33: #{tpu_custom_call.1} parent=23 // pred_check
          %p264 = pneg %p113
        $region34: #{tpu_custom_call.1} parent=23 // pred_check_branch
          %266 = sbr.rel (%p264) target = $region36
        $region35: #{tpu_custom_call.1} parent=23 // pred_region
          %s267 = sand.u32 %s20, 1
          %s268 = scalar_lea.sflag [#allocation10], %s267
          %s269 = sand.u32 %s103, 1
          %s270 = smul.addr %s269, 2
          %s271 = scalar_lea.vmem [#allocation9], %s270
          %s272 = smul.u32 2, %s20
          %274 = vsyncadd %s268, 0
          %s275 = scalar_lea.hbm %s3, %s272
          %s277 = sshll.u32 %s275, 4
          %s278 = int_to_ptr.hbm [resolvable:$true] %s277
          %s279 = sshll.u32 %s271, 4
          %s280 = int_to_ptr.vmem [resolvable:$true] %s279
          %282 = dma.hbm_to_vmem [thread:$0]  %s278, 32, %s280, %s268
        $region36: #{tpu_custom_call.1} parent=23 // pred_fallthru
          _
        // Predicated region
        $region37: #{tpu_custom_call.1} parent=23 // pred_check
          %p283 = pneg %p139
        $region38: #{tpu_custom_call.1} parent=23 // pred_check_branch
          %285 = sbr.rel (%p283) target = $region40
        $region39: #{tpu_custom_call.1} parent=23 // pred_region
          %s286 = sand.u32 %s20, 1
          %s287 = scalar_lea.sflag [#allocation10], %s286
          %s288 = sand.u32 %s129, 1
          %s289 = smul.addr %s288, 128
          %s290 = scalar_lea.vmem [#allocation11], %s289
          %s291 = smul.u32 32, %s20
          %293 = vsyncadd %s287, 0
          %s294 = smul.addr %s291, 4
          %s295 = scalar_lea.hbm %s4, %s294
          %s296 = sshll.u32 %s295, 4
          %s297 = int_to_ptr.hbm [resolvable:$true] %s296
          %s298 = sshll.u32 %s290, 4
          %s299 = int_to_ptr.vmem [resolvable:$true] %s298
          %304 = dma.hbm_to_vmem [thread:$0]  %s297, 2048, %s299, %s287, 64, 64, 4
        $region40: #{tpu_custom_call.1} parent=23 // pred_fallthru
          _
      $region24: #{tpu_custom_call.1} parent=5 // pred_fallthru
        _
      %p305 = scmp.le.s32.totalorder 1, %s20
      %p306 = scmp.lt.s32.totalorder %s20, 3
      %p307 = pnand %p305, %p306
      %p308 = pneg %p307
      // Predicated region
      $region41: #{tpu_custom_call.1} parent=5 // pred_check
        _
      $region42: #{tpu_custom_call.1} parent=5 // pred_check_branch
        %310 = sbr.rel (%p307) target = $region44
      $region43: #{tpu_custom_call.1} parent=5 // pred_region
        %s311 = ssub.s32 %s20, 1
        // Predicated region
        $region45: #{tpu_custom_call.1} parent=43 // pred_check
          %p312 = pneg %p41
        $region46: #{tpu_custom_call.1} parent=43 // pred_check_branch
          %314 = sbr.rel (%p312) target = $region48
        $region47: #{tpu_custom_call.1} parent=43 // pred_region
          %316 = dma.done [#allocation4], 256
        $region48: #{tpu_custom_call.1} parent=43 // pred_fallthru
          _
        %s317 = sand.u32 %s25, 1
        %s318 = scalar_lea.sflag [#allocation7], %s317
        %s319 = sand.u32 %s54, 1
        %s320 = smul.addr %s319, 128
        %s321 = scalar_lea.vmem [#allocation6], %s320
        // Predicated region
        $region49: #{tpu_custom_call.1} parent=43 // pred_check
          %p322 = pneg %p67
        $region50: #{tpu_custom_call.1} parent=43 // pred_check_branch
          %324 = sbr.rel (%p322) target = $region52
        $region51: #{tpu_custom_call.1} parent=43 // pred_region
          %326 = dma.done %s318, 2048
        $region52: #{tpu_custom_call.1} parent=43 // pred_fallthru
          _
        %s327 = sand.u32 %s25, 1
        %s328 = scalar_lea.sflag [#allocation7], %s327
        %s329 = sand.u32 %s80, 1
        %s330 = smul.addr %s329, 2
        %s331 = scalar_lea.vmem [#allocation8], %s330
        // Predicated region
        $region53: #{tpu_custom_call.1} parent=43 // pred_check
          %p332 = pneg %p93
        $region54: #{tpu_custom_call.1} parent=43 // pred_check_branch
          %334 = sbr.rel (%p332) target = $region56
        $region55: #{tpu_custom_call.1} parent=43 // pred_region
          %336 = dma.done %s328, 32
        $region56: #{tpu_custom_call.1} parent=43 // pred_fallthru
          _
        %s337 = sand.u32 %s25, 1
        %s338 = scalar_lea.sflag [#allocation10], %s337
        %s339 = sand.u32 %s106, 1
        %s340 = smul.addr %s339, 2
        %s341 = scalar_lea.vmem [#allocation9], %s340
        // Predicated region
        $region57: #{tpu_custom_call.1} parent=43 // pred_check
          %p342 = pneg %p119
        $region58: #{tpu_custom_call.1} parent=43 // pred_check_branch
          %344 = sbr.rel (%p342) target = $region60
        $region59: #{tpu_custom_call.1} parent=43 // pred_region
          %346 = dma.done %s338, 32
        $region60: #{tpu_custom_call.1} parent=43 // pred_fallthru
          _
        %s347 = sand.u32 %s25, 1
        %s348 = scalar_lea.sflag [#allocation10], %s347
        %s349 = sand.u32 %s132, 1
        %s350 = smul.addr %s349, 128
        %s351 = scalar_lea.vmem [#allocation11], %s350
        // Predicated region
        $region61: #{tpu_custom_call.1} parent=43 // pred_check
          %p352 = pneg %p145
        $region62: #{tpu_custom_call.1} parent=43 // pred_check_branch
          %354 = sbr.rel (%p352) target = $region64
        $region63: #{tpu_custom_call.1} parent=43 // pred_region
          %356 = dma.done %s348, 2048
        $region64: #{tpu_custom_call.1} parent=43 // pred_fallthru
          _
        %p357 = pneg %p41
        %p358 = pneg %p38
        %s359 = sand.u32 %s25, 1
        %s360 = scalar_lea.sflag [#allocation7], %s359
        %s361 = sand.u32 %s54, 1
        %s362 = smul.addr %s361, 128
        %s363 = scalar_lea.vmem [#allocation6], %s362
        %p364 = pneg %p67
        %p365 = pneg %p64
        %s366 = sand.u32 %s25, 1
        %s367 = scalar_lea.sflag [#allocation7], %s366
        %s368 = sand.u32 %s80, 1
        %s369 = smul.addr %s368, 2
        %s370 = scalar_lea.vmem [#allocation8], %s369
        %p371 = pneg %p93
        %p372 = pneg %p90
        %s373 = sand.u32 %s25, 1
        %s374 = scalar_lea.sflag [#allocation10], %s373
        %s375 = sand.u32 %s106, 1
        %s376 = smul.addr %s375, 2
        %s377 = scalar_lea.vmem [#allocation9], %s376
        %p378 = pneg %p119
        %p379 = pneg %p116
        %s380 = sand.u32 %s25, 1
        %s381 = scalar_lea.sflag [#allocation10], %s380
        %s382 = sand.u32 %s132, 1
        %s383 = smul.addr %s382, 128
        %s384 = scalar_lea.vmem [#allocation11], %s383
        %p385 = pneg %p145
        %p386 = pneg %p142
        %p387 = pneg %p166
        %p388 = pneg %p163
        %p389 = pneg %p187
        %p390 = pneg %p184
        %s391 = smul.u32 2, %s25
        %s392 = smul.u32 2, %s25
        %s393 = smul.u32 2, %s25
        %s394 = smul.u32 32, %s25
        %p395 = scmp.eq.s32.totalorder %s25, 0
        // Predicated region
        $region65: #{tpu_custom_call.1} parent=43 // pred_check
          %p396 = pneg %p395
        $region66: #{tpu_custom_call.1} parent=43 // pred_check_branch
          %398 = sbr.rel (%p396) target = $region68
        $region67: #{tpu_custom_call.1} parent=43 // pred_region
          %399 = vst [vmem:[#allocation2] sm:$0xff] 0.0
          %400 = vst [vmem:[#allocation2 + $0x8] sm:$0xff] 0.0
        $region68: #{tpu_custom_call.1} parent=43 // pred_fallthru
          _
        %v401 = vld [vmem:[#allocation3] sm:$0xff]
        %v402 = vld [vmem:[#allocation3 + $0x8] sm:$0xff]
        %v403 = vpack.c.bf16 %v402, %v401
        %v404 = vld [vmem:[%s321] sm:$0xff]
        %v405 = vld [vmem:[%s321 + $0x8] sm:$0xff]
        %v406 = vld [vmem:[%s321 + $0x10] sm:$0xff]
        %v407 = vld [vmem:[%s321 + $0x18] sm:$0xff]
        %v408 = vld [vmem:[%s321 + $0x20] sm:$0xff]
        %v409 = vld [vmem:[%s321 + $0x28] sm:$0xff]
        %v410 = vld [vmem:[%s321 + $0x30] sm:$0xff]
        %v411 = vld [vmem:[%s321 + $0x38] sm:$0xff]
        %v412 = vld [vmem:[%s321 + $0x40] sm:$0xff]
        %v413 = vld [vmem:[%s321 + $0x48] sm:$0xff]
        %v414 = vld [vmem:[%s321 + $0x50] sm:$0xff]
        %v415 = vld [vmem:[%s321 + $0x58] sm:$0xff]
        %v416 = vld [vmem:[%s321 + $0x60] sm:$0xff]
        %v417 = vld [vmem:[%s321 + $0x68] sm:$0xff]
        %v418 = vld [vmem:[%s321 + $0x70] sm:$0xff]
        %v419 = vld [vmem:[%s321 + $0x78] sm:$0xff]
        %v436 = vunpack.c.l.b16 %v404
        %v437 = vunpack.c.h.b16 %v404
        %v438 = vunpack.c.l.b16 %v405
        %v439 = vunpack.c.h.b16 %v405
        %v440 = vunpack.c.l.b16 %v406
        %v441 = vunpack.c.h.b16 %v406
        %v442 = vunpack.c.l.b16 %v407
        %v443 = vunpack.c.h.b16 %v407
        %v444 = vunpack.c.l.b16 %v408
        %v445 = vunpack.c.h.b16 %v408
        %v446 = vunpack.c.l.b16 %v409
        %v447 = vunpack.c.h.b16 %v409
        %v448 = vunpack.c.l.b16 %v410
        %v449 = vunpack.c.h.b16 %v410
        %v450 = vunpack.c.l.b16 %v411
        %v451 = vunpack.c.h.b16 %v411
        %v452 = vunpack.c.l.b16 %v412
        %v453 = vunpack.c.h.b16 %v412
        %v454 = vunpack.c.l.b16 %v413
        %v455 = vunpack.c.h.b16 %v413
        %v456 = vunpack.c.l.b16 %v414
        %v457 = vunpack.c.h.b16 %v414
        %v458 = vunpack.c.l.b16 %v415
        %v459 = vunpack.c.h.b16 %v415
        %v460 = vunpack.c.l.b16 %v416
        %v461 = vunpack.c.h.b16 %v416
        %v462 = vunpack.c.l.b16 %v417
        %v463 = vunpack.c.h.b16 %v417
        %v464 = vunpack.c.l.b16 %v418
        %v465 = vunpack.c.h.b16 %v418
        %v466 = vunpack.c.l.b16 %v419
        %v467 = vunpack.c.h.b16 %v419
        %v468 = vpack.c.b16 %v438, %v436
        %v469 = vpack.c.b16 %v439, %v437
        %v470 = vpack.c.b16 %v442, %v440
        %v471 = vpack.c.b16 %v443, %v441
        %v472 = vpack.c.b16 %v446, %v444
        %v473 = vpack.c.b16 %v447, %v445
        %v474 = vpack.c.b16 %v450, %v448
        %v475 = vpack.c.b16 %v451, %v449
        %v476 = vpack.c.b16 %v454, %v452
        %v477 = vpack.c.b16 %v455, %v453
        %v478 = vpack.c.b16 %v458, %v456
        %v479 = vpack.c.b16 %v459, %v457
        %v480 = vpack.c.b16 %v462, %v460
        %v481 = vpack.c.b16 %v463, %v461
        %v482 = vpack.c.b16 %v466, %v464
        %v483 = vpack.c.b16 %v467, %v465
        %500 = vmatpush.bf16.msra.mxu0 %v482
        %501 = vmatpush.bf16.msra.mxu0 %v480
        %502 = vmatpush.bf16.msra.mxu0 %v478
        %503 = vmatpush.bf16.msra.mxu0 %v476
        %504 = vmatpush.bf16.msra.mxu0 %v474
        %505 = vmatpush.bf16.msra.mxu0 %v472
        %506 = vmatpush.bf16.msra.mxu0 %v470
        %507 = vmatpush.bf16.msra.mxu0 %v468
        %508 = vmatmul.bf16.gmra.mxu0 %v403
        %v509 = vpop.f32.mrf.mxu0
        %v510 = vadd.f32 0.0, %v509
        %v511 = vpop.f32.mrf.mxu0
        %v512 = vadd.f32 0.0, %v511
        %513 = vdwg.mxu0
        %514 = vmatpush.bf16.msra.mxu0 %v483
        %515 = vmatpush.bf16.msra.mxu0 %v481
        %516 = vmatpush.bf16.msra.mxu0 %v479
        %517 = vmatpush.bf16.msra.mxu0 %v477
        %518 = vmatpush.bf16.msra.mxu0 %v475
        %519 = vmatpush.bf16.msra.mxu0 %v473
        %520 = vmatpush.bf16.msra.mxu0 %v471
        %521 = vmatpush.bf16.msra.mxu0 %v469
        %522 = vmatmul.bf16.gmra.mxu0 %v403
        %v523 = vpop.f32.mrf.mxu0
        %v524 = vadd.f32 0.0, %v523
        %v525 = vpop.f32.mrf.mxu0
        %v526 = vadd.f32 0.0, %v525
        %527 = vdwg.mxu0
        %v528 = vadd.f32 %v510, %v512
        %v529 = vrot.slane %v528, 4
        %v530 = vadd.f32 %v528, %v529
        %v531 = vrot.slane %v530, 2
        %v532 = vadd.f32 %v530, %v531
        %v533 = vrot.slane %v532, 1
        %v534 = vadd.f32 %v532, %v533
        %v535 = vadd.f32 %v524, %v526
        %v536 = vrot.slane %v535, 4
        %v537 = vadd.f32 %v535, %v536
        %v538 = vrot.slane %v537, 2
        %v539 = vadd.f32 %v537, %v538
        %v540 = vrot.slane %v539, 1
        %v541 = vadd.f32 %v539, %v540
        %v542 = vmul.f32 %v534, 0.0625
        %v543 = vmul.f32 %v541, 0.0625
        %v544 = vmul.f32 %v510, %v510
        %v545 = vmul.f32 %v524, %v524
        %v546 = vmul.f32 %v512, %v512
        %v547 = vmul.f32 %v526, %v526
        %v548 = vadd.f32 %v544, %v546
        %v549 = vrot.slane %v548, 4
        %v550 = vadd.f32 %v548, %v549
        %v551 = vrot.slane %v550, 2
        %v552 = vadd.f32 %v550, %v551
        %v553 = vrot.slane %v552, 1
        %v554 = vadd.f32 %v552, %v553
        %v555 = vadd.f32 %v545, %v547
        %v556 = vrot.slane %v555, 4
        %v557 = vadd.f32 %v555, %v556
        %v558 = vrot.slane %v557, 2
        %v559 = vadd.f32 %v557, %v558
        %v560 = vrot.slane %v559, 1
        %v561 = vadd.f32 %v559, %v560
        %v562 = vmul.f32 %v554, 0.0625
        %v563 = vmul.f32 %v561, 0.0625
        %v564 = vmul.f32 %v542, %v542
        %v565 = vmul.f32 %v543, %v543
        %v566 = vsub.f32 %v562, %v564
        %v567 = vsub.f32 %v563, %v565
        %v568 = vmax.f32 %v566, 0.0
        %v569 = vmax.f32 %v567, 0.0
        %v570 = vld [vmem:[%s331] sm:$0x3]
        %v571 = vadd.f32 %v568, 1e-05
        %v572 = vadd.f32 %v569, 1e-05
        %v573 = vrsqrt.pop %v571
        %v574 = vmul.f32 %v573, %v571
        %v575 = vmul.f32 %v574, %v573
        %v576 = vmul.f32 0.5, %v575
        %v577 = vsub.f32 1.5, %v576
        %v578 = vmul.f32 %v573, %v577
        %vm579 = vweird.f32 %v571
        %vm580 = vweird.f32 %v573
        %vm581 = vmor %vm579, %vm580
        %v582 = vsel %vm581, %v573, %v578
        %v583 = vrsqrt.pop %v572
        %v584 = vmul.f32 %v583, %v572
        %v585 = vmul.f32 %v584, %v583
        %v586 = vmul.f32 0.5, %v585
        %v587 = vsub.f32 1.5, %v586
        %v588 = vmul.f32 %v583, %v587
        %vm589 = vweird.f32 %v572
        %vm590 = vweird.f32 %v583
        %vm591 = vmor %vm589, %vm590
        %v592 = vsel %vm591, %v583, %v588
        %v595 = vrot.slane %v592, 7
        %vm596 = vcmask 1040384
        %v597 = vsel %vm596, %v582, %v595
        %v599 = vmul.f32 %v570, %v597
        %v600 = vld [vmem:[%s341] sm:$0x3]
        %v602 = vperm.slane %v599, 0
        %v603 = vperm.slane %v599, 1
        %v606 = vmul.f32 %v542, %v602
        %v607 = vmul.f32 %v543, %v603
        %v610 = vrot.slane %v607, 7
        %v611 = vsel %vm596, %v606, %v610
        %v613 = vsub.f32 %v600, %v611
        %v614 = vmul.f32 %v510, %v602
        %v615 = vmul.f32 %v524, %v603
        %v616 = vmul.f32 %v512, %v602
        %v617 = vmul.f32 %v526, %v603
        %v619 = vperm.slane %v613, 0
        %v620 = vperm.slane %v613, 1
        %v623 = vadd.f32 %v614, %v619
        %v624 = vadd.f32 %v615, %v620
        %v625 = vadd.f32 %v616, %v619
        %v626 = vadd.f32 %v617, %v620
        %v627 = vmax.f32 %v623, 0.0
        %v628 = vmax.f32 %v624, 0.0
        %v629 = vmax.f32 %v625, 0.0
        %v630 = vmax.f32 %v626, 0.0
        %v631 = vld [vmem:[#allocation2] sm:$0xff]
        %v632 = vld [vmem:[#allocation2 + $0x8] sm:$0xff]
        %v633 = vpack.c.bf16 %v629, %v627
        %v634 = vpack.c.bf16 %v630, %v628
        %v635 = vld [vmem:[%s351] sm:$0xf]
        %v636 = vld [vmem:[%s351 + $0x4] sm:$0xf]
        %v637 = vld [vmem:[%s351 + $0x8] sm:$0xf]
        %v638 = vld [vmem:[%s351 + $0xc] sm:$0xf]
        %v639 = vld [vmem:[%s351 + $0x10] sm:$0xf]
        %v640 = vld [vmem:[%s351 + $0x14] sm:$0xf]
        %v641 = vld [vmem:[%s351 + $0x18] sm:$0xf]
        %v642 = vld [vmem:[%s351 + $0x1c] sm:$0xf]
        %v643 = vld [vmem:[%s351 + $0x20] sm:$0xf]
        %v644 = vld [vmem:[%s351 + $0x24] sm:$0xf]
        %v645 = vld [vmem:[%s351 + $0x28] sm:$0xf]
        %v646 = vld [vmem:[%s351 + $0x2c] sm:$0xf]
        %v647 = vld [vmem:[%s351 + $0x30] sm:$0xf]
        %v648 = vld [vmem:[%s351 + $0x34] sm:$0xf]
        %v649 = vld [vmem:[%s351 + $0x38] sm:$0xf]
        %v650 = vld [vmem:[%s351 + $0x3c] sm:$0xf]
        %v651 = vld [vmem:[%s351 + $0x40] sm:$0xf]
        %v652 = vld [vmem:[%s351 + $0x44] sm:$0xf]
        %v653 = vld [vmem:[%s351 + $0x48] sm:$0xf]
        %v654 = vld [vmem:[%s351 + $0x4c] sm:$0xf]
        %v655 = vld [vmem:[%s351 + $0x50] sm:$0xf]
        %v656 = vld [vmem:[%s351 + $0x54] sm:$0xf]
        %v657 = vld [vmem:[%s351 + $0x58] sm:$0xf]
        %v658 = vld [vmem:[%s351 + $0x5c] sm:$0xf]
        %v659 = vld [vmem:[%s351 + $0x60] sm:$0xf]
        %v660 = vld [vmem:[%s351 + $0x64] sm:$0xf]
        %v661 = vld [vmem:[%s351 + $0x68] sm:$0xf]
        %v662 = vld [vmem:[%s351 + $0x6c] sm:$0xf]
        %v663 = vld [vmem:[%s351 + $0x70] sm:$0xf]
        %v664 = vld [vmem:[%s351 + $0x74] sm:$0xf]
        %v665 = vld [vmem:[%s351 + $0x78] sm:$0xf]
        %v666 = vld [vmem:[%s351 + $0x7c] sm:$0xf]
        %v699 = vunpack.c.l.b16 %v635
        %v700 = vunpack.c.l.b16 %v636
        %v701 = vunpack.c.l.b16 %v637
        %v702 = vunpack.c.l.b16 %v638
        %v703 = vunpack.c.l.b16 %v639
        %v704 = vunpack.c.l.b16 %v640
        %v705 = vunpack.c.l.b16 %v641
        %v706 = vunpack.c.l.b16 %v642
        %v707 = vunpack.c.l.b16 %v643
        %v708 = vunpack.c.l.b16 %v644
        %v709 = vunpack.c.l.b16 %v645
        %v710 = vunpack.c.l.b16 %v646
        %v711 = vunpack.c.l.b16 %v647
        %v712 = vunpack.c.l.b16 %v648
        %v713 = vunpack.c.l.b16 %v649
        %v714 = vunpack.c.l.b16 %v650
        %v715 = vunpack.c.l.b16 %v651
        %v716 = vunpack.c.l.b16 %v652
        %v717 = vunpack.c.l.b16 %v653
        %v718 = vunpack.c.l.b16 %v654
        %v719 = vunpack.c.l.b16 %v655
        %v720 = vunpack.c.l.b16 %v656
        %v721 = vunpack.c.l.b16 %v657
        %v722 = vunpack.c.l.b16 %v658
        %v723 = vunpack.c.l.b16 %v659
        %v724 = vunpack.c.l.b16 %v660
        %v725 = vunpack.c.l.b16 %v661
        %v726 = vunpack.c.l.b16 %v662
        %v727 = vunpack.c.l.b16 %v663
        %v728 = vunpack.c.l.b16 %v664
        %v729 = vunpack.c.l.b16 %v665
        %v730 = vunpack.c.l.b16 %v666
        %v731 = vpack.c.b16 %v700, %v699
        %v732 = vpack.c.b16 %v702, %v701
        %v733 = vpack.c.b16 %v704, %v703
        %v734 = vpack.c.b16 %v706, %v705
        %v735 = vpack.c.b16 %v708, %v707
        %v736 = vpack.c.b16 %v710, %v709
        %v737 = vpack.c.b16 %v712, %v711
        %v738 = vpack.c.b16 %v714, %v713
        %v739 = vpack.c.b16 %v716, %v715
        %v740 = vpack.c.b16 %v718, %v717
        %v741 = vpack.c.b16 %v720, %v719
        %v742 = vpack.c.b16 %v722, %v721
        %v743 = vpack.c.b16 %v724, %v723
        %v744 = vpack.c.b16 %v726, %v725
        %v745 = vpack.c.b16 %v728, %v727
        %v746 = vpack.c.b16 %v730, %v729
        %763 = vmatpush.bf16.msra.mxu0 %v738
        %764 = vmatpush.bf16.msra.mxu0 %v737
        %765 = vmatpush.bf16.msra.mxu0 %v736
        %766 = vmatpush.bf16.msra.mxu0 %v735
        %767 = vmatpush.bf16.msra.mxu0 %v734
        %768 = vmatpush.bf16.msra.mxu0 %v733
        %769 = vmatpush.bf16.msra.mxu0 %v732
        %770 = vmatpush.bf16.msra.mxu0 %v731
        %771 = vmatmul.bf16.gmra.mxu0 %v633
        %v772 = vpop.f32.mrf.mxu0
        %v773 = vadd.f32 0.0, %v772
        %v774 = vpop.f32.mrf.mxu0
        %v775 = vadd.f32 0.0, %v774
        %776 = vdwg.mxu0
        %777 = vmatpush.bf16.msra.mxu0 %v746
        %778 = vmatpush.bf16.msra.mxu0 %v745
        %779 = vmatpush.bf16.msra.mxu0 %v744
        %780 = vmatpush.bf16.msra.mxu0 %v743
        %781 = vmatpush.bf16.msra.mxu0 %v742
        %782 = vmatpush.bf16.msra.mxu0 %v741
        %783 = vmatpush.bf16.msra.mxu0 %v740
        %784 = vmatpush.bf16.msra.mxu0 %v739
        %785 = vmatmul.bf16.gmra.mxu0 %v634
        %v786 = vpop.f32.mrf.mxu0
        %v787 = vadd.f32 %v773, %v786
        %v788 = vpop.f32.mrf.mxu0
        %v789 = vadd.f32 %v775, %v788
        %790 = vdwg.mxu0
        %v791 = vadd.f32 %v631, %v787
        %v792 = vadd.f32 %v632, %v789
        %793 = vst [vmem:[#allocation2] sm:$0xff] %v791
        %794 = vst [vmem:[#allocation2 + $0x8] sm:$0xff] %v792
        %p795 = scmp.eq.s32.totalorder %s25, 1
        // Predicated region
        $region69: #{tpu_custom_call.1} parent=43 // pred_check
          %p796 = pneg %p795
        $region70: #{tpu_custom_call.1} parent=43 // pred_check_branch
          %798 = sbr.rel (%p796) target = $region72
        $region71: #{tpu_custom_call.1} parent=43 // pred_region
          %v799 = vld [vmem:[#allocation2] sm:$0xff]
          %v800 = vld [vmem:[#allocation2 + $0x8] sm:$0xff]
          %v801 = vld [vmem:[%s5] sm:$0x1]
          %v803 = vperm.slane %v801, 0
          %v805 = vadd.f32 %v799, %v803
          %v806 = vadd.f32 %v800, %v803
          %v807 = vld [vmem:[#allocation3] sm:$0xff]
          %v808 = vld [vmem:[#allocation3 + $0x8] sm:$0xff]
          %v809 = vadd.f32 %v805, %v807
          %v810 = vadd.f32 %v806, %v808
          %811 = vst [vmem:[#allocation12] sm:$0xff] %v809
          %812 = vst [vmem:[#allocation12 + $0x8] sm:$0xff] %v810
        $region72: #{tpu_custom_call.1} parent=43 // pred_fallthru
          _
        // Predicated region
        $region73: #{tpu_custom_call.1} parent=43 // pred_check
          %p813 = pneg %p184
        $region74: #{tpu_custom_call.1} parent=43 // pred_check_branch
          %815 = sbr.rel (%p813) target = $region76
        $region75: #{tpu_custom_call.1} parent=43 // pred_region
          %817 = vsyncadd [#allocation5], 0
          %s818 = sshll.u32 [#allocation12], 4
          %s819 = int_to_ptr.vmem [resolvable:$true] %s818
          %s820 = sshll.u32 %s6, 4
          %s821 = int_to_ptr.hbm [resolvable:$true] %s820
          %826 = dma.vmem_to_hbm [thread:$0]  %s819, 256, %s821, [#allocation5], 128, 128, 8
        $region76: #{tpu_custom_call.1} parent=43 // pred_fallthru
          _
        // Predicated region
        $region77: #{tpu_custom_call.1} parent=43 // pred_check
          %p827 = pneg %p184
        $region78: #{tpu_custom_call.1} parent=43 // pred_check_branch
          %829 = sbr.rel (%p827) target = $region80
        $region79: #{tpu_custom_call.1} parent=43 // pred_region
          %831 = dma.done [#allocation5], 256
        $region80: #{tpu_custom_call.1} parent=43 // pred_fallthru
          _
      $region44: #{tpu_custom_call.1} parent=5 // pred_fallthru
        _
      %p832 = scmp.le.s32.totalorder 2, %s20
      // Predicated region
      $region81: #{tpu_custom_call.1} parent=5 // pred_check
        %p833 = pneg %p832
      $region82: #{tpu_custom_call.1} parent=5 // pred_check_branch
        %835 = sbr.rel (%p833) target = $region84
      $region83: #{tpu_custom_call.1} parent=5 // pred_region
        %s836 = ssub.s32 %s20, 2
      $region84: #{tpu_custom_call.1} parent=5 // pred_fallthru
        _
    $region6: #{tpu_custom_call.1} parent=1 // loop_footer
      %s24 = sadd.s32 1, %s20
    $region7: #{tpu_custom_call.1} parent=1 // loop_footer_branch
      %19 = sbr.rel target = $region3
    $region8: #{tpu_custom_call.1} parent=1 // loop_exit
      _
    %837 = vsyncpa [#allocation4], 1
    %s838 = scalar_lea.sflag [#allocation4], 1
    %839 = vsyncpa %s838, 1
    %840 = vsyncpa [#allocation7], 1
    %s841 = scalar_lea.sflag [#allocation7], 1
    %842 = vsyncpa %s841, 1
    %843 = vsyncpa [#allocation10], 1
    %s844 = scalar_lea.sflag [#allocation10], 1
    %845 = vsyncpa %s844, 1
    %846 = vsyncpa [#allocation5], 1
    %s847 = scalar_lea.sflag [#allocation5], 1
    %848 = vsyncpa %s847, 1

</llo_original>
